<compile_context>
chip_gen: v7x
topology: tpu7x:2x2x1
jax: 0.10.0
libtpu: 0.0.40
codegen_flags: <defaults>
</compile_context>

<pallas_src>
import functools
import math

import jax
import jax.numpy as jnp
from jax.experimental import pallas as pl
from jax.experimental.pallas import tpu as pltpu

EPS = 1e-5


# ----------------------------- kernel -----------------------------
def _layer_norm_kernel(x_ref, g_ref, b_ref, o_ref, *, eps):
    x = x_ref[...].astype(jnp.float32)                       # (rows_tile, dim)
    mu = jnp.mean(x, axis=-1, keepdims=True)
    xc = x - mu
    var = jnp.mean(xc * xc, axis=-1, keepdims=True)          # biased var, as F.layer_norm
    y = xc * jax.lax.rsqrt(var + eps)
    o_ref[...] = (y * g_ref[...] + b_ref[...]).astype(o_ref.dtype)


def _pick_row_tile(rows):
    # Largest sublane-aligned row tile that evenly divides `rows`.
    for cand in (2048, 1024, 512, 256, 128, 64, 32, 16, 8):
        if rows >= cand and rows % cand == 0:
            return cand
    return rows  # tiny / odd row counts: one full-array block (always legal)


# ----------------------------- wrapper -----------------------------
def layer_norm(x, gamma, beta, *, eps=EPS):
    """Pallas TPU equivalent of musiclm LayerNorm.forward (layer_norm over last dim)."""
    orig_shape = x.shape
    dim = orig_shape[-1]
    rows = math.prod(orig_shape[:-1]) if len(orig_shape) > 1 else 1

    x2 = x.reshape(rows, dim)
    g2 = gamma.reshape(1, dim).astype(jnp.float32)
    b2 = beta.reshape(1, dim).astype(jnp.float32)

    rt = _pick_row_tile(rows)
    grid = (rows // rt,)

    out = pl.pallas_call(
        functools.partial(_layer_norm_kernel, eps=eps),
        out_shape=jax.ShapeDtypeStruct((rows, dim), x.dtype),
        grid=grid,
        in_specs=[
            pl.BlockSpec((rt, dim), lambda i: (i, 0)),       # x row tile
            pl.BlockSpec((1, dim), lambda i: (0, 0)),        # gamma (VMEM-resident)
            pl.BlockSpec((1, dim), lambda i: (0, 0)),        # beta  (VMEM-resident)
        ],
        out_specs=pl.BlockSpec((rt, dim), lambda i: (i, 0)),
        compiler_params=pltpu.CompilerParams(
            dimension_semantics=("parallel",)),               # megacore sharding on v7x
    )(x2, g2, b2)
    return out.reshape(orig_shape)


# ----------------------------- module params -----------------------------
def init_params(dim):
    # nn.Parameter(torch.ones(dim)); register_buffer('beta', torch.zeros(dim))
    return {"gamma": jnp.ones((dim,), jnp.float32),
            "beta": jnp.zeros((dim,), jnp.float32)}


def layer_norm_module(params, x):
    return layer_norm(x, params["gamma"], params["beta"])


# ----------------------------- pure-JAX reference -----------------------------
def _reference(x, gamma, beta, eps=EPS):
    mu = jnp.mean(x, axis=-1, keepdims=True)
    var = jnp.mean((x - mu) ** 2, axis=-1, keepdims=True)
    return (x - mu) * jax.lax.rsqrt(var + eps) * gamma + beta


# ----------------------------- main -----------------------------
if __name__ == "__main__":
    BATCH, SEQ, DIM = 2, 8, 32
    key = jax.random.PRNGKey(0)
    x = jax.random.normal(key, (BATCH, SEQ, DIM), dtype=jnp.float32)
    params = init_params(DIM)

    fwd = jax.jit(layer_norm_module)
    out = jax.block_until_ready(fwd(params, x))

    assert out.shape == (BATCH, SEQ, DIM), out.shape
    assert bool(jnp.all(jnp.isfinite(out)))
    ref = _reference(x, params["gamma"], params["beta"])
    assert bool(jnp.allclose(out, ref, atol=1e-5, rtol=1e-5)), \
        float(jnp.max(jnp.abs(out - ref)))
    print("KERNEL_OK")
</pallas_src>

<mosaic_0001>
module attributes {stable_mosaic.version = 11 : i64} {
  func.func @_layer_norm_kernel(%arg0: i32, %arg1: memref<16x32xf32, #tpu.memory_space<vmem>>, %arg2: memref<1x32xf32, #tpu.memory_space<vmem>>, %arg3: memref<1x32xf32, #tpu.memory_space<vmem>>, %arg4: memref<16x32xf32, #tpu.memory_space<vmem>>) attributes {dimension_semantics = [#tpu.dimension_semantics<parallel>], iteration_bounds = array<i64: 1>, scalar_prefetch = 0 : i64, scratch_operands = 0 : i64, tpu.core_type = #tpu.core_type<tc>, window_params = [{transform_indices = @transform_0, window_bounds = array<i64: 16, 32>}, {pipeline_mode = #tpu.pipeline_mode<synchronous>, transform_indices = @transform_1, window_bounds = array<i64: 1, 32>}, {pipeline_mode = #tpu.pipeline_mode<synchronous>, transform_indices = @transform_2, window_bounds = array<i64: 1, 32>}, {transform_indices = @transform_3, window_bounds = array<i64: 16, 32>}]} {
    %c0 = arith.constant 0 : index
    %c0_0 = arith.constant 0 : index
    %0 = vector.load %arg1[%c0, %c0_0] : memref<16x32xf32, #tpu.memory_space<vmem>>, vector<16x32xf32>
    %cst = arith.constant dense<0.000000e+00> : vector<16xf32>
    %1 = vector.multi_reduction <add>, %0, %cst [1] : vector<16x32xf32> to vector<16xf32>
    %2 = vector.shape_cast %1 : vector<16xf32> to vector<16x1xf32>
    %cst_1 = arith.constant 3.200000e+01 : f32
    %3 = vector.broadcast %cst_1 : f32 to vector<16x1xf32>
    %4 = arith.divf %2, %3 : vector<16x1xf32>
    %5 = vector.broadcast %4 : vector<16x1xf32> to vector<16x32xf32>
    %6 = arith.subf %0, %5 : vector<16x32xf32>
    %7 = arith.mulf %6, %6 : vector<16x32xf32>
    %cst_2 = arith.constant dense<0.000000e+00> : vector<16xf32>
    %8 = vector.multi_reduction <add>, %7, %cst_2 [1] : vector<16x32xf32> to vector<16xf32>
    %9 = vector.shape_cast %8 : vector<16xf32> to vector<16x1xf32>
    %cst_3 = arith.constant 3.200000e+01 : f32
    %10 = vector.broadcast %cst_3 : f32 to vector<16x1xf32>
    %11 = arith.divf %9, %10 : vector<16x1xf32>
    %cst_4 = arith.constant 9.99999974E-6 : f32
    %12 = vector.broadcast %cst_4 : f32 to vector<16x1xf32>
    %13 = arith.addf %11, %12 : vector<16x1xf32>
    %14 = math.rsqrt %13 : vector<16x1xf32>
    %15 = vector.broadcast %14 : vector<16x1xf32> to vector<16x32xf32>
    %16 = arith.mulf %6, %15 : vector<16x32xf32>
    %c0_5 = arith.constant 0 : index
    %c0_6 = arith.constant 0 : index
    %17 = vector.load %arg2[%c0_5, %c0_6] : memref<1x32xf32, #tpu.memory_space<vmem>>, vector<1x32xf32>
    %18 = vector.broadcast %17 : vector<1x32xf32> to vector<16x32xf32>
    %19 = arith.mulf %16, %18 : vector<16x32xf32>
    %c0_7 = arith.constant 0 : index
    %c0_8 = arith.constant 0 : index
    %20 = vector.load %arg3[%c0_7, %c0_8] : memref<1x32xf32, #tpu.memory_space<vmem>>, vector<1x32xf32>
    %21 = vector.broadcast %20 : vector<1x32xf32> to vector<16x32xf32>
    %22 = arith.addf %19, %21 : vector<16x32xf32>
    %c0_9 = arith.constant 0 : index
    %c0_10 = arith.constant 0 : index
    %23 = vector.load %arg4[%c0_9, %c0_10] : memref<16x32xf32, #tpu.memory_space<vmem>>, vector<16x32xf32>
    tpu.vector_store %arg4[%c0_9, %c0_10], %22 {strides = array<i32>} : memref<16x32xf32, #tpu.memory_space<vmem>>, vector<16x32xf32>,
    return
  }
  func.func @transform_0(%arg0: i32) -> (i32, i32) {
    %c0_i32 = arith.constant 0 : i32
    %c0_i32_0 = arith.constant 0 : i32
    return %arg0, %c0_i32 : i32, i32
  }
  func.func @transform_1(%arg0: i32) -> (i32, i32) {
    %c0_i32 = arith.constant 0 : i32
    %c0_i32_0 = arith.constant 0 : i32
    %c0_i32_1 = arith.constant 0 : i32
    return %c0_i32, %c0_i32_0 : i32, i32
  }
  func.func @transform_2(%arg0: i32) -> (i32, i32) {
    %c0_i32 = arith.constant 0 : i32
    %c0_i32_0 = arith.constant 0 : i32
    %c0_i32_1 = arith.constant 0 : i32
    return %c0_i32, %c0_i32_0 : i32, i32
  }
  func.func @transform_3(%arg0: i32) -> (i32, i32) {
    %c0_i32 = arith.constant 0 : i32
    %c0_i32_0 = arith.constant 0 : i32
    return %arg0, %c0_i32 : i32, i32
  }
}

</mosaic_0001>

<llo_original>
// kernel: layer_norm_module.1
$region0: #{layer_norm_module.1}
  #allocation0 [shape = 'u32[]', space=smem, size = 0x4, offset = 0x4, fixed_abs, tag = 'smem constant byte address 0x4 - core index']
  #allocation1 [shape = 'u32[144,128]{1,0:T(1,128)}', space=vmem, size = 0x12000, scoped, tag = 'internal scratch']
  %s0 = inlined_call_operand.vmem [shape: f32[16,32], index: 0, kind: input, shape index: {}]
  %s1 = inlined_call_operand.vmem [shape: f32[1,32], index: 1, kind: input, shape index: {}]
  %s2 = inlined_call_operand.vmem [shape: f32[1,32], index: 2, kind: input, shape index: {}]
  %s3 = inlined_call_operand.hbm [shape: f32[16,32], index: 3, kind: output, shape index: {}]
  %s4 = sld [smem:[#allocation0]]
  $region22: #{layer_norm_module.1} parent=0
    _
  %s6 = ssub.s32 1, %s4
  %s7 = scalar_select 0, %s6, %s4
  $region1: #{layer_norm_module.1} parent=0
    #allocation2 [shape = 'u8[8192]{0}', space=vmem, size = 0x2000, scoped, tag = 'output window, operand 0, single buffered']
    #allocation3 [shape = 's32[1]{0}', space=sflag, size = 0x4, scoped, tag = 'scoped memory for layer_norm_module.1']
    %8 = vsyncpa [#allocation3], 0
    // Predicated region
    $region2: #{layer_norm_module.1} parent=1 // pred_check
      _
    $region3: #{layer_norm_module.1} parent=1 // pred_check_branch
      %10 = sbr.rel (0) target = $region5
    $region4: #{layer_norm_module.1} parent=1 // pred_region
      _
    $region5: #{layer_norm_module.1} parent=1 // pred_fallthru
      _
    // Predicated region
    $region6: #{layer_norm_module.1} parent=1 // pred_check
      _
    $region7: #{layer_norm_module.1} parent=1 // pred_check_branch
      %12 = sbr.rel (0) target = $region9
    $region8: #{layer_norm_module.1} parent=1 // pred_region
      _
    $region9: #{layer_norm_module.1} parent=1 // pred_fallthru
      _
    // Predicated region
    $region10: #{layer_norm_module.1} parent=1 // pred_check
      _
    $region11: #{layer_norm_module.1} parent=1 // pred_check_branch
      %14 = sbr.rel (0) target = $region13
    $region12: #{layer_norm_module.1} parent=1 // pred_region
      _
    $region13: #{layer_norm_module.1} parent=1 // pred_fallthru
      _
    %v15 = vld [vmem:[%s0] sm:$0xff]
    %v16 = vld [vmem:[%s0 + $0x8] sm:$0xff]
    %vm17 = vcmask 261120
    %v18 = vsel %vm17, %v15, 0.0
    %19 = vadd.xlane.f32.xlu0 %v18
    %v20 = vpop.xlane.xlu0 %19
    %v21 = vsel %vm17, %v16, 0.0
    %22 = vadd.xlane.f32.xlu0 %v21
    %v23 = vpop.xlane.xlu0 %22
    %v24 = vrcp.pop 32.0
    %v25 = vmul.f32 %v20, %v24
    %v26 = vmul.f32 %v23, %v24
    %v27 = vsub.f32 %v15, %v25
    %v28 = vsub.f32 %v16, %v26
    %v29 = vmul.f32 %v27, %v27
    %v30 = vmul.f32 %v28, %v28
    %v31 = vsel %vm17, %v29, 0.0
    %32 = vadd.xlane.f32.xlu0 %v31
    %v33 = vpop.xlane.xlu0 %32
    %v34 = vsel %vm17, %v30, 0.0
    %35 = vadd.xlane.f32.xlu0 %v34
    %v36 = vpop.xlane.xlu0 %35
    %v37 = vmul.f32 %v33, %v24
    %v38 = vmul.f32 %v36, %v24
    %v39 = vadd.f32 %v37, 1e-05
    %v40 = vadd.f32 %v38, 1e-05
    %v41 = vrsqrt.pop %v39
    %v42 = vrsqrt.pop %v40
    %v43 = vmul.f32 %v27, %v41
    %v44 = vmul.f32 %v28, %v42
    %v45 = vld [vmem:[%s1] sm:$0x1]
    %v47 = vlaneseq
    %v48 = vshrl.u32 %v47, 7
    %v49 = vsub.s32 0, %v48
    %v50 = vrot.slane %v45, %v49
    %v52 = vmul.f32 %v43, %v50
    %v53 = vmul.f32 %v44, %v50
    %v54 = vld [vmem:[%s2] sm:$0x1]
    %v56 = vlaneseq
    %v57 = vshrl.u32 %v56, 7
    %v58 = vsub.s32 0, %v57
    %v59 = vrot.slane %v54, %v58
    %v61 = vadd.f32 %v52, %v59
    %v62 = vadd.f32 %v53, %v59
    %63 = vst.msk [vmem:[#allocation2] sm:$0xff] %vm17, %v61
    %64 = vst.msk [vmem:[#allocation2 + $0x8] sm:$0xff] %vm17, %v62
    // Predicated region
    $region14: #{layer_norm_module.1} parent=1 // pred_check
      _
    $region15: #{layer_norm_module.1} parent=1 // pred_check_branch
      %66 = sbr.rel (0) target = $region17
    $region16: #{layer_norm_module.1} parent=1 // pred_region
      %s68 = ssub.s32 256, 256
      %69 = vsyncadd [#allocation3], %s68
      %s70 = sshll.u32 [#allocation2], 4
      %s71 = int_to_ptr.vmem [resolvable:$true] %s70
      %76 = dma.vmem_to_hbm [thread:$0]  %s71, 256, %s3, [#allocation3], 128, 128, 8
    $region17: #{layer_norm_module.1} parent=1 // pred_fallthru
      _
    // Predicated region
    $region18: #{layer_norm_module.1} parent=1 // pred_check
      _
    $region19: #{layer_norm_module.1} parent=1 // pred_check_branch
      %78 = sbr.rel (0) target = $region21
    $region20: #{layer_norm_module.1} parent=1 // pred_region
      %79 = dma.done [#allocation3], 256
    $region21: #{layer_norm_module.1} parent=1 // pred_fallthru
      _
    %80 = vsyncpa [#allocation3], 1

</llo_original>
